<compile_context>
chip_gen: v6e
topology: v6e:2x2x1
jax: 0.10.0
libtpu: 0.0.40
codegen_flags: <defaults>
</compile_context>

<pallas_src>
import jax
import jax.numpy as jnp
from jax.experimental import pallas as pl
from jax.experimental.pallas import tpu as pltpu

HIDDEN = 32              # hidden_size
IN_FEAT = 2              # fc_input in_features
LSTM_IN = 7              # LSTMCell input_size == fc_output out_features
LSTM_IN_PAD = 8          # LSTM input padded to a sublane multiple
GATES = 4 * HIDDEN       # 128 == exactly one vreg of lanes
OUT_PAD = GATES          # pad 7-wide output rows to 128 lanes (lane-dense store)

assert GATES == 128, "layout below assumes 4*HIDDEN == 128"


def _fused_kernel(fc_in_ref, xs_ref, w_zh_ref, w_out_ref, b_ref, hc0_ref,
                  out_ref, hc_out_ref):
    """Whole T-step recurrence in one invocation.

    fc_in_ref : SMEM (3,)        [w_in[0,0], w_in[0,1], b_in[0]]
    xs_ref    : VMEM (2, T, 8)   inputs, feature-major, lane-padded 7 -> 8
    w_zh_ref  : VMEM (40, 128)   rows 0..6 = w_ih^T, row 7 = 0 (pad), rows 8..39 = w_hh^T
    w_out_ref : VMEM (32, 128)   w_out^T, columns 7..127 zero
    b_ref     : VMEM (2, 128)    row 0 = b_ih + b_hh, row 1 = b_out (zero padded)
    hc0_ref   : VMEM (2, 32)     row 0 = h_0, row 1 = c_0  (aliased to hc_out)
    out_ref   : VMEM (T, 128)    per-step fc_output (columns 7..127 are zero)
    hc_out_ref: VMEM (2, 32)     row 0 = h_T, row 1 = c_T
    """
    T = xs_ref.shape[1]
    H = HIDDEN

    # fc_input + tanh for the whole sequence: pure VPU (no MXU, no transpose).
    w0 = fc_in_ref[0]
    w1 = fc_in_ref[1]
    b0 = fc_in_ref[2]
    lstm_ins = jnp.tanh(w0 * xs_ref[0] + w1 * xs_ref[1] + b0)       # (T, 8); lane 7 junk

    # Input projection of every timestep in ONE MXU matmul (hoisted out of the loop).
    # Zero pad-row 7 of w_ih^T cancels the junk lane of lstm_ins (asserted at pack time).
    w_ih_pad = w_zh_ref[0:LSTM_IN_PAD, :]                           # (8, 128); row 7 = 0
    w_hh_t = w_zh_ref[LSTM_IN_PAD:LSTM_IN_PAD + H, :]               # (32, 128)
    b_gate = b_ref[0:1, :]                                          # (1, 128)
    gates_x = (jnp.dot(lstm_ins, w_ih_pad,
                       preferred_element_type=jnp.float32) + b_gate)  # (T, 128)

    h = hc0_ref[0:1, :]                                             # (1, 32)
    c = hc0_ref[1:2, :]                                             # (1, 32)

    # Recurrent loop: T is small & static -> fully unrolled; per step only one
    # (1,32)x(32,128) matmul + gate elementwise math is on the serial chain.
    h_tanh = []
    for t in range(T):
        gates = gates_x[t:t + 1, :] + jnp.dot(
            h, w_hh_t, preferred_element_type=jnp.float32)          # (1, 128)
        # Two full-128-lane EUP pushes instead of four 32-lane sliced ones.
        sig = jax.nn.sigmoid(gates)                                  # (1, 128)
        th = jnp.tanh(gates)                                         # (1, 128)
        i_g = sig[:, 0 * H:1 * H]
        f_g = sig[:, 1 * H:2 * H]
        g_g = th[:, 2 * H:3 * H]
        o_g = sig[:, 3 * H:4 * H]
        c = f_g * c + i_g * g_g
        h = o_g * jnp.tanh(c)
        # tanh(h) for fc_output is off the h/c chain; EUP is idle here -> free.
        h_tanh.append(jnp.tanh(h))

    # All per-step tanh(h) kept in registers; no (T,32) VMEM scratch round trip.
    h_all = jnp.concatenate(h_tanh, axis=0)                          # (T, 32)

    # fc_output for every timestep in one lane-dense MXU matmul + unmasked store.
    out_ref[...] = (
        jnp.dot(h_all, w_out_ref[...], preferred_element_type=jnp.float32)
        + b_ref[1:2, :]
    )
    hc_out_ref[0:1, :] = h
    hc_out_ref[1:2, :] = c


def pack_params(params):
    """Pack/pad parameters ONCE (outside the per-call path) for the fused kernel."""
    (w_in, b_in, w_ih, b_ih, w_hh, b_hh, w_out, b_out) = params

    fc_in = jnp.concatenate(
        [w_in.reshape(-1), b_in.reshape(-1)]).astype(jnp.float32)        # (3,)

    w_ih_t_pad = jnp.pad(w_ih.T.astype(jnp.float32),
                         ((0, LSTM_IN_PAD - LSTM_IN), (0, 0)))           # (8, 128)
    w_zh = jnp.concatenate(
        [w_ih_t_pad, w_hh.T.astype(jnp.float32)], axis=0)                # (40, 128)
    w_out_pad = jnp.pad(w_out.T.astype(jnp.float32),
                        ((0, 0), (0, OUT_PAD - LSTM_IN)))                # (32, 128)
    biases = jnp.stack(
        [(b_ih + b_hh).astype(jnp.float32),
         jnp.pad(b_out.astype(jnp.float32), (0, OUT_PAD - LSTM_IN))])    # (2, 128)

    # Invariant guard: the padded w_ih row must be exactly zero so the junk lane 7 of
    # tanh(fc_input) contributes nothing to the gates.
    if not isinstance(w_zh, jax.core.Tracer):
        assert bool(jnp.all(w_zh[LSTM_IN_PAD - 1] == 0.0)), \
            "padded w_ih^T row must be all zeros"
    return fc_in, w_zh, w_out_pad, biases


@jax.jit
def simple_model2_forward_seq(xs, packed_params, h0, c0):
    """Applies SimpleModel2.forward to each x in xs (T steps) in ONE pallas_call.

    xs: (T, 7, 2). packed_params: output of pack_params(). h0/c0: (1, HIDDEN).
    Returns (outs (T, 7), h_T (1, H), c_T (1, H)).
    Per-call host-side work is only the xs transpose/pad + hc0 stack.
    """
    fc_in, w_zh, w_out_pad, biases = packed_params
    T = xs.shape[0]

    xs_t = jnp.transpose(xs.astype(jnp.float32), (2, 0, 1))              # (2, T, 7)
    xs_t = jnp.pad(xs_t, ((0, 0), (0, 0), (0, LSTM_IN_PAD - LSTM_IN)))   # (2, T, 8)
    hc0 = jnp.concatenate([h0, c0], axis=0).astype(jnp.float32)          # (2, 32)

    vmem = pl.BlockSpec(memory_space=pltpu.MemorySpace.VMEM)
    smem = pl.BlockSpec(memory_space=pltpu.MemorySpace.SMEM)
    out_pad, hc_out = pl.pallas_call(
        _fused_kernel,
        out_shape=(jax.ShapeDtypeStruct((T, OUT_PAD), jnp.float32),
                   jax.ShapeDtypeStruct((2, HIDDEN), jnp.float32)),
        in_specs=[smem, vmem, vmem, vmem, vmem, vmem],
        out_specs=(vmem, vmem),
        input_output_aliases={5: 1},      # hc0 buffer reused for (h_T, c_T)
    )(fc_in, xs_t, w_zh, w_out_pad, biases, hc0)
    return out_pad[:, :LSTM_IN], hc_out[0:1], hc_out[1:2]


def simple_model2_forward(x, packed_params, h, c):
    """Single SimpleModel2.forward step (module semantics). x: (7, 2)."""
    outs, h_new, c_new = simple_model2_forward_seq(x[None], packed_params, h, c)
    return outs[0], h_new, c_new


def init_params(key):
    """Deterministic parameter init mimicking PyTorch Linear/LSTMCell defaults."""
    ks = jax.random.split(key, 8)

    def unif(k, shape, fan_in):
        bound = 1.0 / jnp.sqrt(float(fan_in))
        return jax.random.uniform(k, shape, jnp.float32, -bound, bound)

    w_in = unif(ks[0], (1, IN_FEAT), IN_FEAT)              # fc_input.weight (1, 2)
    b_in = unif(ks[1], (1,), IN_FEAT)                      # fc_input.bias   (1,)
    w_ih = unif(ks[2], (4 * HIDDEN, LSTM_IN), HIDDEN)      # lstm.weight_ih  (4H, 7)
    b_ih = unif(ks[3], (4 * HIDDEN,), HIDDEN)              # lstm.bias_ih    (4H,)
    w_hh = unif(ks[4], (4 * HIDDEN, HIDDEN), HIDDEN)       # lstm.weight_hh  (4H, H)
    b_hh = unif(ks[5], (4 * HIDDEN,), HIDDEN)              # lstm.bias_hh    (4H,)
    w_out = unif(ks[6], (LSTM_IN, HIDDEN), HIDDEN)         # fc_output.weight (7, H)
    b_out = unif(ks[7], (LSTM_IN,), HIDDEN)                # fc_output.bias   (7,)
    return (w_in, b_in, w_ih, b_ih, w_hh, b_hh, w_out, b_out)


def reference_forward_seq(xs, params, h0, c0):
    """Pure-JAX reference of the same per-step semantics (for verification)."""
    (w_in, b_in, w_ih, b_ih, w_hh, b_hh, w_out, b_out) = params
    H = HIDDEN
    h, c = h0, c0
    outs = []
    for t in range(xs.shape[0]):
        u = jnp.tanh(xs[t] @ w_in.T + b_in)                # (7, 1)
        lstm_in = u.T                                      # (1, 7)
        gates = lstm_in @ w_ih.T + b_ih + h @ w_hh.T + b_hh
        i = jax.nn.sigmoid(gates[:, 0 * H:1 * H])
        f = jax.nn.sigmoid(gates[:, 1 * H:2 * H])
        g = jnp.tanh(gates[:, 2 * H:3 * H])
        o = jax.nn.sigmoid(gates[:, 3 * H:4 * H])
        c = f * c + i * g
        h = o * jnp.tanh(c)
        outs.append(jnp.tanh(h) @ w_out.T + b_out)         # (1, 7)
    return jnp.concatenate(outs, axis=0), h, c


if __name__ == "__main__":
    key = jax.random.PRNGKey(0)
    k_param, k_x = jax.random.split(key)

    params = init_params(k_param)
    packed = pack_params(params)            # packed ONCE; reused across calls
    T = 8
    xs = jax.random.normal(k_x, (T, LSTM_IN, IN_FEAT), jnp.float32)   # (8, 7, 2)
    h0 = jnp.zeros((1, HIDDEN), jnp.float32)                          # init_state()
    c0 = jnp.zeros((1, HIDDEN), jnp.float32)

    # Fused multi-step kernel (whole recurrence in one pallas_call).
    outs, h_T, c_T = simple_model2_forward_seq(xs, packed, h0, c0)
    outs, h_T, c_T = jax.block_until_ready((outs, h_T, c_T))

    outs_ref, h_ref, c_ref = reference_forward_seq(xs, params, h0, c0)
    assert jnp.allclose(outs, outs_ref, atol=1e-4, rtol=1e-4)
    assert jnp.allclose(h_T, h_ref, atol=1e-4, rtol=1e-4)
    assert jnp.allclose(c_T, c_ref, atol=1e-4, rtol=1e-4)

    # Single-step path (module-equivalent forward) goes through the same kernel.
    out1, h1, c1 = simple_model2_forward(xs[0], packed, h0, c0)
    out1 = jax.block_until_ready(out1)
    assert jnp.allclose(out1, outs_ref[0], atol=1e-4, rtol=1e-4)

    print("KERNEL_OK")
</pallas_src>

<mosaic_0001>
module attributes {stable_mosaic.version = 11 : i64} {
  func.func @_fused_kernel(%arg0: memref<3xf32, #tpu.memory_space<smem>>, %arg1: memref<2x8x8xf32, #tpu.memory_space<vmem>>, %arg2: memref<40x128xf32, #tpu.memory_space<vmem>>, %arg3: memref<32x128xf32, #tpu.memory_space<vmem>>, %arg4: memref<2x128xf32, #tpu.memory_space<vmem>>, %arg5: memref<2x32xf32, #tpu.memory_space<vmem>>, %arg6: memref<8x128xf32, #tpu.memory_space<vmem>>, %arg7: memref<2x32xf32, #tpu.memory_space<vmem>>) attributes {dimension_semantics = [], scalar_prefetch = 0 : i64, scratch_operands = 0 : i64, tpu.core_type = #tpu.core_type<tc>} {
    %c0 = arith.constant 0 : index
    %0 = memref.load %arg0[%c0] : memref<3xf32, #tpu.memory_space<smem>>
    %c1 = arith.constant 1 : index
    %1 = memref.load %arg0[%c1] : memref<3xf32, #tpu.memory_space<smem>>
    %c2 = arith.constant 2 : index
    %2 = memref.load %arg0[%c2] : memref<3xf32, #tpu.memory_space<smem>>
    %c0_0 = arith.constant 0 : index
    %c0_1 = arith.constant 0 : index
    %c0_2 = arith.constant 0 : index
    %3 = vector.load %arg1[%c0_0, %c0_1, %c0_2] : memref<2x8x8xf32, #tpu.memory_space<vmem>>, vector<1x8x8xf32>
    %4 = vector.shape_cast %3 : vector<1x8x8xf32> to vector<8x8xf32>
    %5 = vector.broadcast %0 : f32 to vector<8x8xf32>
    %6 = arith.mulf %5, %4 : vector<8x8xf32>
    %c1_3 = arith.constant 1 : index
    %c0_4 = arith.constant 0 : index
    %c0_5 = arith.constant 0 : index
    %7 = vector.load %arg1[%c1_3, %c0_4, %c0_5] : memref<2x8x8xf32, #tpu.memory_space<vmem>>, vector<1x8x8xf32>
    %8 = vector.shape_cast %7 : vector<1x8x8xf32> to vector<8x8xf32>
    %9 = vector.broadcast %1 : f32 to vector<8x8xf32>
    %10 = arith.mulf %9, %8 : vector<8x8xf32>
    %11 = arith.addf %6, %10 : vector<8x8xf32>
    %12 = vector.broadcast %2 : f32 to vector<8x8xf32>
    %13 = arith.addf %11, %12 : vector<8x8xf32>
    %14 = math.tanh %13 : vector<8x8xf32>
    %c0_6 = arith.constant 0 : index
    %c0_7 = arith.constant 0 : index
    %15 = vector.load %arg2[%c0_6, %c0_7] : memref<40x128xf32, #tpu.memory_space<vmem>>, vector<8x128xf32>
    %c8 = arith.constant 8 : index
    %c0_8 = arith.constant 0 : index
    %16 = vector.load %arg2[%c8, %c0_8] : memref<40x128xf32, #tpu.memory_space<vmem>>, vector<32x128xf32>
    %c0_9 = arith.constant 0 : index
    %c0_10 = arith.constant 0 : index
    %17 = vector.load %arg4[%c0_9, %c0_10] : memref<2x128xf32, #tpu.memory_space<vmem>>, vector<1x128xf32>
    %cst = arith.constant dense<0.000000e+00> : vector<8x128xf32>
    %18 = tpu.matmul %14, %15, %cst {dimension_numbers = #tpu.dot_dimension_numbers<[1], [0], [0], [1], [0, 0, 1, 1], [], []>} : vector<8x8xf32>, vector<8x128xf32>, vector<8x128xf32> -> vector<8x128xf32>
    %19 = vector.broadcast %17 : vector<1x128xf32> to vector<8x128xf32>
    %20 = arith.addf %18, %19 : vector<8x128xf32>
    %c0_11 = arith.constant 0 : index
    %c0_12 = arith.constant 0 : index
    %21 = vector.load %arg5[%c0_11, %c0_12] : memref<2x32xf32, #tpu.memory_space<vmem>>, vector<1x32xf32>
    %c1_13 = arith.constant 1 : index
    %c0_14 = arith.constant 0 : index
    %22 = vector.load %arg5[%c1_13, %c0_14] : memref<2x32xf32, #tpu.memory_space<vmem>>, vector<1x32xf32>
    %23 = vector.extract_strided_slice %20 {offsets = [0, 0], sizes = [1, 128], strides = [1, 1]} : vector<8x128xf32> to vector<1x128xf32>
    %cst_15 = arith.constant dense<0.000000e+00> : vector<1x128xf32>
    %24 = tpu.matmul %21, %16, %cst_15 {dimension_numbers = #tpu.dot_dimension_numbers<[1], [0], [0], [1], [0, 0, 1, 1], [], []>} : vector<1x32xf32>, vector<32x128xf32>, vector<1x128xf32> -> vector<1x128xf32>
    %25 = arith.addf %23, %24 : vector<1x128xf32>
    %26 = arith.negf %25 : vector<1x128xf32>
    %27 = math.exp %26 : vector<1x128xf32>
    %cst_16 = arith.constant 1.000000e+00 : f32
    %28 = vector.broadcast %cst_16 : f32 to vector<1x128xf32>
    %29 = arith.addf %28, %27 : vector<1x128xf32>
    %30 = arith.divf %28, %29 : vector<1x128xf32>
    %31 = math.tanh %25 : vector<1x128xf32>
    %32 = vector.extract_strided_slice %30 {offsets = [0, 0], sizes = [1, 32], strides = [1, 1]} : vector<1x128xf32> to vector<1x32xf32>
    %33 = vector.extract_strided_slice %30 {offsets = [0, 32], sizes = [1, 32], strides = [1, 1]} : vector<1x128xf32> to vector<1x32xf32>
    %34 = vector.extract_strided_slice %31 {offsets = [0, 64], sizes = [1, 32], strides = [1, 1]} : vector<1x128xf32> to vector<1x32xf32>
    %35 = vector.extract_strided_slice %30 {offsets = [0, 96], sizes = [1, 32], strides = [1, 1]} : vector<1x128xf32> to vector<1x32xf32>
    %36 = arith.mulf %33, %22 : vector<1x32xf32>
    %37 = arith.mulf %32, %34 : vector<1x32xf32>
    %38 = arith.addf %36, %37 : vector<1x32xf32>
    %39 = math.tanh %38 : vector<1x32xf32>
    %40 = arith.mulf %35, %39 : vector<1x32xf32>
    %41 = math.tanh %40 : vector<1x32xf32>
    %42 = vector.extract_strided_slice %20 {offsets = [1, 0], sizes = [1, 128], strides = [1, 1]} : vector<8x128xf32> to vector<1x128xf32>
    %cst_17 = arith.constant dense<0.000000e+00> : vector<1x128xf32>
    %43 = tpu.matmul %40, %16, %cst_17 {dimension_numbers = #tpu.dot_dimension_numbers<[1], [0], [0], [1], [0, 0, 1, 1], [], []>} : vector<1x32xf32>, vector<32x128xf32>, vector<1x128xf32> -> vector<1x128xf32>
    %44 = arith.addf %42, %43 : vector<1x128xf32>
    %45 = arith.negf %44 : vector<1x128xf32>
    %46 = math.exp %45 : vector<1x128xf32>
    %cst_18 = arith.constant 1.000000e+00 : f32
    %47 = vector.broadcast %cst_18 : f32 to vector<1x128xf32>
    %48 = arith.addf %47, %46 : vector<1x128xf32>
    %49 = arith.divf %47, %48 : vector<1x128xf32>
    %50 = math.tanh %44 : vector<1x128xf32>
    %51 = vector.extract_strided_slice %49 {offsets = [0, 0], sizes = [1, 32], strides = [1, 1]} : vector<1x128xf32> to vector<1x32xf32>
    %52 = vector.extract_strided_slice %49 {offsets = [0, 32], sizes = [1, 32], strides = [1, 1]} : vector<1x128xf32> to vector<1x32xf32>
    %53 = vector.extract_strided_slice %50 {offsets = [0, 64], sizes = [1, 32], strides = [1, 1]} : vector<1x128xf32> to vector<1x32xf32>
    %54 = vector.extract_strided_slice %49 {offsets = [0, 96], sizes = [1, 32], strides = [1, 1]} : vector<1x128xf32> to vector<1x32xf32>
    %55 = arith.mulf %52, %38 : vector<1x32xf32>
    %56 = arith.mulf %51, %53 : vector<1x32xf32>
    %57 = arith.addf %55, %56 : vector<1x32xf32>
    %58 = math.tanh %57 : vector<1x32xf32>
    %59 = arith.mulf %54, %58 : vector<1x32xf32>
    %60 = math.tanh %59 : vector<1x32xf32>
    %61 = vector.extract_strided_slice %20 {offsets = [2, 0], sizes = [1, 128], strides = [1, 1]} : vector<8x128xf32> to vector<1x128xf32>
    %cst_19 = arith.constant dense<0.000000e+00> : vector<1x128xf32>
    %62 = tpu.matmul %59, %16, %cst_19 {dimension_numbers = #tpu.dot_dimension_numbers<[1], [0], [0], [1], [0, 0, 1, 1], [], []>} : vector<1x32xf32>, vector<32x128xf32>, vector<1x128xf32> -> vector<1x128xf32>
    %63 = arith.addf %61, %62 : vector<1x128xf32>
    %64 = arith.negf %63 : vector<1x128xf32>
    %65 = math.exp %64 : vector<1x128xf32>
    %cst_20 = arith.constant 1.000000e+00 : f32
    %66 = vector.broadcast %cst_20 : f32 to vector<1x128xf32>
    %67 = arith.addf %66, %65 : vector<1x128xf32>
    %68 = arith.divf %66, %67 : vector<1x128xf32>
    %69 = math.tanh %63 : vector<1x128xf32>
    %70 = vector.extract_strided_slice %68 {offsets = [0, 0], sizes = [1, 32], strides = [1, 1]} : vector<1x128xf32> to vector<1x32xf32>
    %71 = vector.extract_strided_slice %68 {offsets = [0, 32], sizes = [1, 32], strides = [1, 1]} : vector<1x128xf32> to vector<1x32xf32>
    %72 = vector.extract_strided_slice %69 {offsets = [0, 64], sizes = [1, 32], strides = [1, 1]} : vector<1x128xf32> to vector<1x32xf32>
    %73 = vector.extract_strided_slice %68 {offsets = [0, 96], sizes = [1, 32], strides = [1, 1]} : vector<1x128xf32> to vector<1x32xf32>
    %74 = arith.mulf %71, %57 : vector<1x32xf32>
    %75 = arith.mulf %70, %72 : vector<1x32xf32>
    %76 = arith.addf %74, %75 : vector<1x32xf32>
    %77 = math.tanh %76 : vector<1x32xf32>
    %78 = arith.mulf %73, %77 : vector<1x32xf32>
    %79 = math.tanh %78 : vector<1x32xf32>
    %80 = vector.extract_strided_slice %20 {offsets = [3, 0], sizes = [1, 128], strides = [1, 1]} : vector<8x128xf32> to vector<1x128xf32>
    %cst_21 = arith.constant dense<0.000000e+00> : vector<1x128xf32>
    %81 = tpu.matmul %78, %16, %cst_21 {dimension_numbers = #tpu.dot_dimension_numbers<[1], [0], [0], [1], [0, 0, 1, 1], [], []>} : vector<1x32xf32>, vector<32x128xf32>, vector<1x128xf32> -> vector<1x128xf32>
    %82 = arith.addf %80, %81 : vector<1x128xf32>
    %83 = arith.negf %82 : vector<1x128xf32>
    %84 = math.exp %83 : vector<1x128xf32>
    %cst_22 = arith.constant 1.000000e+00 : f32
    %85 = vector.broadcast %cst_22 : f32 to vector<1x128xf32>
    %86 = arith.addf %85, %84 : vector<1x128xf32>
    %87 = arith.divf %85, %86 : vector<1x128xf32>
    %88 = math.tanh %82 : vector<1x128xf32>
    %89 = vector.extract_strided_slice %87 {offsets = [0, 0], sizes = [1, 32], strides = [1, 1]} : vector<1x128xf32> to vector<1x32xf32>
    %90 = vector.extract_strided_slice %87 {offsets = [0, 32], sizes = [1, 32], strides = [1, 1]} : vector<1x128xf32> to vector<1x32xf32>
    %91 = vector.extract_strided_slice %88 {offsets = [0, 64], sizes = [1, 32], strides = [1, 1]} : vector<1x128xf32> to vector<1x32xf32>
    %92 = vector.extract_strided_slice %87 {offsets = [0, 96], sizes = [1, 32], strides = [1, 1]} : vector<1x128xf32> to vector<1x32xf32>
    %93 = arith.mulf %90, %76 : vector<1x32xf32>
    %94 = arith.mulf %89, %91 : vector<1x32xf32>
    %95 = arith.addf %93, %94 : vector<1x32xf32>
    %96 = math.tanh %95 : vector<1x32xf32>
    %97 = arith.mulf %92, %96 : vector<1x32xf32>
    %98 = math.tanh %97 : vector<1x32xf32>
    %99 = vector.extract_strided_slice %20 {offsets = [4, 0], sizes = [1, 128], strides = [1, 1]} : vector<8x128xf32> to vector<1x128xf32>
    %cst_23 = arith.constant dense<0.000000e+00> : vector<1x128xf32>
    %100 = tpu.matmul %97, %16, %cst_23 {dimension_numbers = #tpu.dot_dimension_numbers<[1], [0], [0], [1], [0, 0, 1, 1], [], []>} : vector<1x32xf32>, vector<32x128xf32>, vector<1x128xf32> -> vector<1x128xf32>
    %101 = arith.addf %99, %100 : vector<1x128xf32>
    %102 = arith.negf %101 : vector<1x128xf32>
    %103 = math.exp %102 : vector<1x128xf32>
    %cst_24 = arith.constant 1.000000e+00 : f32
    %104 = vector.broadcast %cst_24 : f32 to vector<1x128xf32>
    %105 = arith.addf %104, %103 : vector<1x128xf32>
    %106 = arith.divf %104, %105 : vector<1x128xf32>
    %107 = math.tanh %101 : vector<1x128xf32>
    %108 = vector.extract_strided_slice %106 {offsets = [0, 0], sizes = [1, 32], strides = [1, 1]} : vector<1x128xf32> to vector<1x32xf32>
    %109 = vector.extract_strided_slice %106 {offsets = [0, 32], sizes = [1, 32], strides = [1, 1]} : vector<1x128xf32> to vector<1x32xf32>
    %110 = vector.extract_strided_slice %107 {offsets = [0, 64], sizes = [1, 32], strides = [1, 1]} : vector<1x128xf32> to vector<1x32xf32>
    %111 = vector.extract_strided_slice %106 {offsets = [0, 96], sizes = [1, 32], strides = [1, 1]} : vector<1x128xf32> to vector<1x32xf32>
    %112 = arith.mulf %109, %95 : vector<1x32xf32>
    %113 = arith.mulf %108, %110 : vector<1x32xf32>
    %114 = arith.addf %112, %113 : vector<1x32xf32>
    %115 = math.tanh %114 : vector<1x32xf32>
    %116 = arith.mulf %111, %115 : vector<1x32xf32>
    %117 = math.tanh %116 : vector<1x32xf32>
    %118 = vector.extract_strided_slice %20 {offsets = [5, 0], sizes = [1, 128], strides = [1, 1]} : vector<8x128xf32> to vector<1x128xf32>
    %cst_25 = arith.constant dense<0.000000e+00> : vector<1x128xf32>
    %119 = tpu.matmul %116, %16, %cst_25 {dimension_numbers = #tpu.dot_dimension_numbers<[1], [0], [0], [1], [0, 0, 1, 1], [], []>} : vector<1x32xf32>, vector<32x128xf32>, vector<1x128xf32> -> vector<1x128xf32>
    %120 = arith.addf %118, %119 : vector<1x128xf32>
    %121 = arith.negf %120 : vector<1x128xf32>
    %122 = math.exp %121 : vector<1x128xf32>
    %cst_26 = arith.constant 1.000000e+00 : f32
    %123 = vector.broadcast %cst_26 : f32 to vector<1x128xf32>
    %124 = arith.addf %123, %122 : vector<1x128xf32>
    %125 = arith.divf %123, %124 : vector<1x128xf32>
    %126 = math.tanh %120 : vector<1x128xf32>
    %127 = vector.extract_strided_slice %125 {offsets = [0, 0], sizes = [1, 32], strides = [1, 1]} : vector<1x128xf32> to vector<1x32xf32>
    %128 = vector.extract_strided_slice %125 {offsets = [0, 32], sizes = [1, 32], strides = [1, 1]} : vector<1x128xf32> to vector<1x32xf32>
    %129 = vector.extract_strided_slice %126 {offsets = [0, 64], sizes = [1, 32], strides = [1, 1]} : vector<1x128xf32> to vector<1x32xf32>
    %130 = vector.extract_strided_slice %125 {offsets = [0, 96], sizes = [1, 32], strides = [1, 1]} : vector<1x128xf32> to vector<1x32xf32>
    %131 = arith.mulf %128, %114 : vector<1x32xf32>
    %132 = arith.mulf %127, %129 : vector<1x32xf32>
    %133 = arith.addf %131, %132 : vector<1x32xf32>
    %134 = math.tanh %133 : vector<1x32xf32>
    %135 = arith.mulf %130, %134 : vector<1x32xf32>
    %136 = math.tanh %135 : vector<1x32xf32>
    %137 = vector.extract_strided_slice %20 {offsets = [6, 0], sizes = [1, 128], strides = [1, 1]} : vector<8x128xf32> to vector<1x128xf32>
    %cst_27 = arith.constant dense<0.000000e+00> : vector<1x128xf32>
    %138 = tpu.matmul %135, %16, %cst_27 {dimension_numbers = #tpu.dot_dimension_numbers<[1], [0], [0], [1], [0, 0, 1, 1], [], []>} : vector<1x32xf32>, vector<32x128xf32>, vector<1x128xf32> -> vector<1x128xf32>
    %139 = arith.addf %137, %138 : vector<1x128xf32>
    %140 = arith.negf %139 : vector<1x128xf32>
    %141 = math.exp %140 : vector<1x128xf32>
    %cst_28 = arith.constant 1.000000e+00 : f32
    %142 = vector.broadcast %cst_28 : f32 to vector<1x128xf32>
    %143 = arith.addf %142, %141 : vector<1x128xf32>
    %144 = arith.divf %142, %143 : vector<1x128xf32>
    %145 = math.tanh %139 : vector<1x128xf32>
    %146 = vector.extract_strided_slice %144 {offsets = [0, 0], sizes = [1, 32], strides = [1, 1]} : vector<1x128xf32> to vector<1x32xf32>
    %147 = vector.extract_strided_slice %144 {offsets = [0, 32], sizes = [1, 32], strides = [1, 1]} : vector<1x128xf32> to vector<1x32xf32>
    %148 = vector.extract_strided_slice %145 {offsets = [0, 64], sizes = [1, 32], strides = [1, 1]} : vector<1x128xf32> to vector<1x32xf32>
    %149 = vector.extract_strided_slice %144 {offsets = [0, 96], sizes = [1, 32], strides = [1, 1]} : vector<1x128xf32> to vector<1x32xf32>
    %150 = arith.mulf %147, %133 : vector<1x32xf32>
    %151 = arith.mulf %146, %148 : vector<1x32xf32>
    %152 = arith.addf %150, %151 : vector<1x32xf32>
    %153 = math.tanh %152 : vector<1x32xf32>
    %154 = arith.mulf %149, %153 : vector<1x32xf32>
    %155 = math.tanh %154 : vector<1x32xf32>
    %156 = vector.extract_strided_slice %20 {offsets = [7, 0], sizes = [1, 128], strides = [1, 1]} : vector<8x128xf32> to vector<1x128xf32>
    %cst_29 = arith.constant dense<0.000000e+00> : vector<1x128xf32>
    %157 = tpu.matmul %154, %16, %cst_29 {dimension_numbers = #tpu.dot_dimension_numbers<[1], [0], [0], [1], [0, 0, 1, 1], [], []>} : vector<1x32xf32>, vector<32x128xf32>, vector<1x128xf32> -> vector<1x128xf32>
    %158 = arith.addf %156, %157 : vector<1x128xf32>
    %159 = arith.negf %158 : vector<1x128xf32>
    %160 = math.exp %159 : vector<1x128xf32>
    %cst_30 = arith.constant 1.000000e+00 : f32
    %161 = vector.broadcast %cst_30 : f32 to vector<1x128xf32>
    %162 = arith.addf %161, %160 : vector<1x128xf32>
    %163 = arith.divf %161, %162 : vector<1x128xf32>
    %164 = math.tanh %158 : vector<1x128xf32>
    %165 = vector.extract_strided_slice %163 {offsets = [0, 0], sizes = [1, 32], strides = [1, 1]} : vector<1x128xf32> to vector<1x32xf32>
    %166 = vector.extract_strided_slice %163 {offsets = [0, 32], sizes = [1, 32], strides = [1, 1]} : vector<1x128xf32> to vector<1x32xf32>
    %167 = vector.extract_strided_slice %164 {offsets = [0, 64], sizes = [1, 32], strides = [1, 1]} : vector<1x128xf32> to vector<1x32xf32>
    %168 = vector.extract_strided_slice %163 {offsets = [0, 96], sizes = [1, 32], strides = [1, 1]} : vector<1x128xf32> to vector<1x32xf32>
    %169 = arith.mulf %166, %152 : vector<1x32xf32>
    %170 = arith.mulf %165, %167 : vector<1x32xf32>
    %171 = arith.addf %169, %170 : vector<1x32xf32>
    %172 = math.tanh %171 : vector<1x32xf32>
    %173 = arith.mulf %168, %172 : vector<1x32xf32>
    %174 = math.tanh %173 : vector<1x32xf32>
    %175 = tpu.concatenate %41, %60, %79, %98, %117, %136, %155, %174 in 0 : vector<1x32xf32>, vector<1x32xf32>, vector<1x32xf32>, vector<1x32xf32>, vector<1x32xf32>, vector<1x32xf32>, vector<1x32xf32>, vector<1x32xf32> -> vector<8x32xf32>
    %c0_31 = arith.constant 0 : index
    %c0_32 = arith.constant 0 : index
    %176 = vector.load %arg3[%c0_31, %c0_32] : memref<32x128xf32, #tpu.memory_space<vmem>>, vector<32x128xf32>
    %cst_33 = arith.constant dense<0.000000e+00> : vector<8x128xf32>
    %177 = tpu.matmul %175, %176, %cst_33 {dimension_numbers = #tpu.dot_dimension_numbers<[1], [0], [0], [1], [0, 0, 1, 1], [], []>} : vector<8x32xf32>, vector<32x128xf32>, vector<8x128xf32> -> vector<8x128xf32>
    %c1_34 = arith.constant 1 : index
    %c0_35 = arith.constant 0 : index
    %178 = vector.load %arg4[%c1_34, %c0_35] : memref<2x128xf32, #tpu.memory_space<vmem>>, vector<1x128xf32>
    %179 = vector.broadcast %178 : vector<1x128xf32> to vector<8x128xf32>
    %180 = arith.addf %177, %179 : vector<8x128xf32>
    %c0_36 = arith.constant 0 : index
    %c0_37 = arith.constant 0 : index
    %181 = vector.load %arg6[%c0_36, %c0_37] : memref<8x128xf32, #tpu.memory_space<vmem>>, vector<8x128xf32>
    tpu.vector_store %arg6[%c0_36, %c0_37], %180 {strides = array<i32>} : memref<8x128xf32, #tpu.memory_space<vmem>>, vector<8x128xf32>,
    %c0_38 = arith.constant 0 : index
    %c0_39 = arith.constant 0 : index
    %182 = vector.load %arg7[%c0_38, %c0_39] : memref<2x32xf32, #tpu.memory_space<vmem>>, vector<1x32xf32>
    tpu.vector_store %arg7[%c0_38, %c0_39], %173 {strides = array<i32>} : memref<2x32xf32, #tpu.memory_space<vmem>>, vector<1x32xf32>,
    %c1_40 = arith.constant 1 : index
    %c0_41 = arith.constant 0 : index
    %183 = vector.load %arg7[%c1_40, %c0_41] : memref<2x32xf32, #tpu.memory_space<vmem>>, vector<1x32xf32>
    tpu.vector_store %arg7[%c1_40, %c0_41], %171 {strides = array<i32>} : memref<2x32xf32, #tpu.memory_space<vmem>>, vector<1x32xf32>,
    return
  }
}

</mosaic_0001>

<llo_original>
// kernel: simple_model2_forward_seq.1
$region0: #{simple_model2_forward_seq.1}
  #allocation0 [shape = 'u32[]', space=smem, size = 0x4, offset = 0x4, fixed_abs, tag = 'smem constant byte address 0x4 - core index']
  #allocation1 [shape = 'u32[144,128]{1,0:T(1,128)}', space=vmem, size = 0x12000, scoped, tag = 'internal scratch']
  %s0 = inlined_call_operand.hbm [shape: f32[3], index: 0, kind: input, shape index: {}]
  %s1 = inlined_call_operand.vmem [shape: f32[2,8,8], index: 1, kind: input, shape index: {}]
  %s2 = inlined_call_operand.vmem [shape: f32[40,128], index: 2, kind: input, shape index: {}]
  %s3 = inlined_call_operand.vmem [shape: f32[32,128], index: 3, kind: input, shape index: {}]
  %s4 = inlined_call_operand.hbm [shape: f32[2,128], index: 4, kind: input, shape index: {}]
  %s5 = inlined_call_operand.vmem [shape: f32[2,32], index: 5, kind: input, shape index: {}, may-alias: {5,7}]
  %s6 = inlined_call_operand.hbm [shape: f32[8,128], index: 6, kind: output, shape index: {0}]
  %s7 = inlined_call_operand.vmem [shape: f32[2,32], index: 7, kind: output, shape index: {1}, may-alias: {5,7}]
  %8 = xla_tuple %s6, %s7
  %s9 = sld [smem:[#allocation0]]
  $region50: #{simple_model2_forward_seq.1} parent=0
    _
  %s11 = ssub.s32 1, %s9
  %s12 = scalar_select 0, %s11, %s9
  $region1: #{simple_model2_forward_seq.1} parent=0
    #allocation2 [shape = 'u8[512]{0}', space=smem, size = 0x200, scoped, tag = 'input window, operand 0, single buffered']
    #allocation3 [shape = 's32[1]{0}', space=sflag, size = 0x4, scoped, tag = 'scoped memory for simple_model2_forward_seq.1']
    #allocation4 [shape = 's32[1]{0}', space=sflag, size = 0x4, scoped, tag = 'scoped memory for simple_model2_forward_seq.1']
    #allocation5 [shape = 's32[1]{0}', space=sflag, size = 0x4, scoped, tag = 'scoped memory for simple_model2_forward_seq.1']
    #allocation6 [shape = 'u8[1024]{0}', space=vmem, size = 0x400, scoped, tag = 'input window, operand 4, single buffered']
    #allocation7 [shape = 'u8[4096]{0}', space=vmem, size = 0x1000, scoped, tag = 'output window, operand 0, single buffered']
    %13 = vsyncpa [#allocation5], 0
    %14 = vsyncpa [#allocation3], 0
    %15 = vsyncpa [#allocation4], 0
    // Predicated region
    $region2: #{simple_model2_forward_seq.1} parent=1 // pred_check
      _
    $region3: #{simple_model2_forward_seq.1} parent=1 // pred_check_branch
      %17 = sbr.rel (0) target = $region5
    $region4: #{simple_model2_forward_seq.1} parent=1 // pred_region
      %s19 = ssub.s32 16, 16
      %20 = vsyncadd [#allocation5], %s19
      %23 = dma.hbm_to_smem %s0, 16, [#allocation2], [#allocation5]
    $region5: #{simple_model2_forward_seq.1} parent=1 // pred_fallthru
      _
    // Predicated region
    $region6: #{simple_model2_forward_seq.1} parent=1 // pred_check
      _
    $region7: #{simple_model2_forward_seq.1} parent=1 // pred_check_branch
      %25 = sbr.rel (0) target = $region9
    $region8: #{simple_model2_forward_seq.1} parent=1 // pred_region
      _
    $region9: #{simple_model2_forward_seq.1} parent=1 // pred_fallthru
      _
    // Predicated region
    $region10: #{simple_model2_forward_seq.1} parent=1 // pred_check
      _
    $region11: #{simple_model2_forward_seq.1} parent=1 // pred_check_branch
      %27 = sbr.rel (0) target = $region13
    $region12: #{simple_model2_forward_seq.1} parent=1 // pred_region
      _
    $region13: #{simple_model2_forward_seq.1} parent=1 // pred_fallthru
      _
    // Predicated region
    $region14: #{simple_model2_forward_seq.1} parent=1 // pred_check
      _
    $region15: #{simple_model2_forward_seq.1} parent=1 // pred_check_branch
      %29 = sbr.rel (0) target = $region17
    $region16: #{simple_model2_forward_seq.1} parent=1 // pred_region
      _
    $region17: #{simple_model2_forward_seq.1} parent=1 // pred_fallthru
      _
    // Predicated region
    $region18: #{simple_model2_forward_seq.1} parent=1 // pred_check
      _
    $region19: #{simple_model2_forward_seq.1} parent=1 // pred_check_branch
      %31 = sbr.rel (0) target = $region21
    $region20: #{simple_model2_forward_seq.1} parent=1 // pred_region
      %s33 = ssub.s32 32, 32
      %34 = vsyncadd [#allocation3], %s33
      %s36 = sshll.u32 [#allocation6], 4
      %s37 = int_to_ptr.vmem [resolvable:$true] %s36
      %39 = dma.hbm_to_vmem [thread:$0]  %s4, 32, %s37, [#allocation3]
    $region21: #{simple_model2_forward_seq.1} parent=1 // pred_fallthru
      _
    // Predicated region
    $region22: #{simple_model2_forward_seq.1} parent=1 // pred_check
      _
    $region23: #{simple_model2_forward_seq.1} parent=1 // pred_check_branch
      %41 = sbr.rel (0) target = $region25
    $region24: #{simple_model2_forward_seq.1} parent=1 // pred_region
      _
    $region25: #{simple_model2_forward_seq.1} parent=1 // pred_fallthru
      _
    // Predicated region
    $region26: #{simple_model2_forward_seq.1} parent=1 // pred_check
      _
    $region27: #{simple_model2_forward_seq.1} parent=1 // pred_check_branch
      %43 = sbr.rel (0) target = $region29
    $region28: #{simple_model2_forward_seq.1} parent=1 // pred_region
      %44 = dma.done [#allocation5], 16
    $region29: #{simple_model2_forward_seq.1} parent=1 // pred_fallthru
      _
    // Predicated region
    $region30: #{simple_model2_forward_seq.1} parent=1 // pred_check
      _
    $region31: #{simple_model2_forward_seq.1} parent=1 // pred_check_branch
      %46 = sbr.rel (0) target = $region33
    $region32: #{simple_model2_forward_seq.1} parent=1 // pred_region
      %47 = dma.done [#allocation3], 32
    $region33: #{simple_model2_forward_seq.1} parent=1 // pred_fallthru
      _
    %48 = sfence
    %s49 = sld [smem:[#allocation2]]
    %s50 = sld [smem:[#allocation2 + $0x1]]
    %s51 = sld [smem:[#allocation2 + $0x2]]
    %v52 = vld [vmem:[%s1] sm:$0xff]
    %v53 = vstv %s49
    %v54 = vmul.f32 %v53, %v52
    %s55 = scalar_lea.vmem %s1, 8
    %v56 = vld [vmem:[%s55] sm:$0xff]
    %v57 = vstv %s50
    %v58 = vmul.f32 %v57, %v56
    %v59 = vadd.f32 %v54, %v58
    %v60 = vstv %s51
    %v61 = vadd.f32 %v59, %v60
    %v62 = vtanh.pop %v61
    %v63 = vld [vmem:[%s2] sm:$0xff]
    %v64 = vld [vmem:[%s2 + $0x8] sm:$0xff]
    %v65 = vld [vmem:[%s2 + $0x10] sm:$0xff]
    %v66 = vld [vmem:[%s2 + $0x18] sm:$0xff]
    %v67 = vld [vmem:[%s2 + $0x20] sm:$0xff]
    %v68 = vld [vmem:[#allocation6] sm:$0x1]
    %v69 = vlaneseq
    %v70 = vshrl.u32 %v69, 7
    %v71 = vsub.s32 0, %v70
    %v72 = vrot.slane %v68, %v71
    %vm73 = vcmask 64512
    %v75 = vsel %vm73, %v62, 0
    %77 = vmatprep.subr.mxu0 0.0
    %78 = vmatpush1.msra.mxu0 0.0
    %79 = vmatprep.subr.mxu0 0.0
    %80 = vmatpush1.msra.mxu0 0.0
    %81 = vmatprep.subr.mxu0 0.0
    %82 = vmatpush1.msra.mxu0 0.0
    %83 = vmatprep.subr.mxu0 0.0
    %84 = vmatpush1.msra.mxu0 0.0
    %85 = vmatprep.subr.mxu0 0.0
    %86 = vmatpush1.msra.mxu0 0.0
    %87 = vmatprep.subr.mxu0 0.0
    %88 = vmatpush1.msra.mxu0 0.0
    %89 = vmatprep.subr.mxu0 0.0
    %90 = vmatpush1.msra.mxu0 0.0
    %91 = vmatprep.subr.mxu0 0.0
    %92 = vmatpush1.msra.mxu0 0.0
    %93 = vmatprep.subr.mxu0 0.0
    %94 = vmatpush1.msra.mxu0 0.0
    %95 = vmatprep.subr.mxu0 0.0
    %96 = vmatpush1.msra.mxu0 0.0
    %97 = vmatprep.subr.mxu0 0.0
    %98 = vmatpush1.msra.mxu0 0.0
    %99 = vmatprep.subr.mxu0 0.0
    %100 = vmatpush1.msra.mxu0 0.0
    %101 = vmatprep.subr.mxu0 0.0
    %102 = vmatpush1.msra.mxu0 0.0
    %103 = vmatprep.subr.mxu0 0.0
    %104 = vmatpush1.msra.mxu0 0.0
    %105 = vmatprep.subr.mxu0 0.0
    %106 = vmatpush1.msra.mxu0 0.0
    %107 = vmatprep.subr.mxu0 0.0
    %108 = vmatpush1.msra.mxu0 %v63
    %109 = vmatprep.subr.mxu0 0.0
    %110 = vmatpush2.msra.mxu0 0.0
    %111 = vmatprep.subr.mxu0 0.0
    %112 = vmatpush2.msra.mxu0 0.0
    %113 = vmatprep.subr.mxu0 0.0
    %114 = vmatpush2.msra.mxu0 0.0
    %115 = vmatprep.subr.mxu0 0.0
    %116 = vmatpush2.msra.mxu0 0.0
    %117 = vmatprep.subr.mxu0 0.0
    %118 = vmatpush2.msra.mxu0 0.0
    %119 = vmatprep.subr.mxu0 0.0
    %120 = vmatpush2.msra.mxu0 0.0
    %121 = vmatprep.subr.mxu0 0.0
    %122 = vmatpush2.msra.mxu0 0.0
    %123 = vmatprep.subr.mxu0 0.0
    %124 = vmatpush2.msra.mxu0 0.0
    %125 = vmatprep.subr.mxu0 0.0
    %126 = vmatpush2.msra.mxu0 0.0
    %127 = vmatprep.subr.mxu0 0.0
    %128 = vmatpush2.msra.mxu0 0.0
    %129 = vmatprep.subr.mxu0 0.0
    %130 = vmatpush2.msra.mxu0 0.0
    %131 = vmatprep.subr.mxu0 0.0
    %132 = vmatpush2.msra.mxu0 0.0
    %133 = vmatprep.subr.mxu0 0.0
    %134 = vmatpush2.msra.mxu0 0.0
    %135 = vmatprep.subr.mxu0 0.0
    %136 = vmatpush2.msra.mxu0 0.0
    %137 = vmatprep.subr.mxu0 0.0
    %138 = vmatpush2.msra.mxu0 0.0
    %139 = vmatprep.subr.mxu0 0.0
    %140 = vmatpush2.msra.mxu0 0.0
    %141 = vmatprep.mubr.f32.mxu0 0.0
    %142 = vmatmul.mubr.f32.gmra.mxu0 %v75
    %v143 = vpop.f32.mrf.mxu0
    %v144 = vadd.f32 %v72, %v143
    %v145 = vpop.f32.mrf.mxu0
    %146 = vdwg.mxu0
    %v147 = vld [vmem:[%s5] sm:$0x1]
    %v148 = vld [vmem:[%s5 + $0x1] sm:$0x1]
    %vm149 = vcmask 261120
    %v151 = vsel %vm149, %v147, 0
    %153 = vmatprep.subr.mxu0 0.0
    %154 = vmatpush1.msra.mxu0 0.0
    %155 = vmatprep.subr.mxu0 0.0
    %156 = vmatpush1.msra.mxu0 0.0
    %157 = vmatprep.subr.mxu0 0.0
    %158 = vmatpush1.msra.mxu0 0.0
    %159 = vmatprep.subr.mxu0 0.0
    %160 = vmatpush1.msra.mxu0 0.0
    %161 = vmatprep.subr.mxu0 0.0
    %162 = vmatpush1.msra.mxu0 0.0
    %163 = vmatprep.subr.mxu0 0.0
    %164 = vmatpush1.msra.mxu0 0.0
    %165 = vmatprep.subr.mxu0 0.0
    %166 = vmatpush1.msra.mxu0 0.0
    %167 = vmatprep.subr.mxu0 0.0
    %168 = vmatpush1.msra.mxu0 0.0
    %169 = vmatprep.subr.mxu0 0.0
    %170 = vmatpush1.msra.mxu0 0.0
    %171 = vmatprep.subr.mxu0 0.0
    %172 = vmatpush1.msra.mxu0 0.0
    %173 = vmatprep.subr.mxu0 0.0
    %174 = vmatpush1.msra.mxu0 0.0
    %175 = vmatprep.subr.mxu0 0.0
    %176 = vmatpush1.msra.mxu0 0.0
    %177 = vmatprep.subr.mxu0 0.0
    %178 = vmatpush1.msra.mxu0 %v67
    %179 = vmatprep.subr.mxu0 0.0
    %180 = vmatpush1.msra.mxu0 %v66
    %181 = vmatprep.subr.mxu0 0.0
    %182 = vmatpush1.msra.mxu0 %v65
    %183 = vmatprep.subr.mxu0 0.0
    %184 = vmatpush1.msra.mxu0 %v64
    %185 = vmatprep.subr.mxu0 0.0
    %186 = vmatpush2.msra.mxu0 0.0
    %187 = vmatprep.subr.mxu0 0.0
    %188 = vmatpush2.msra.mxu0 0.0
    %189 = vmatprep.subr.mxu0 0.0
    %190 = vmatpush2.msra.mxu0 0.0
    %191 = vmatprep.subr.mxu0 0.0
    %192 = vmatpush2.msra.mxu0 0.0
    %193 = vmatprep.subr.mxu0 0.0
    %194 = vmatpush2.msra.mxu0 0.0
    %195 = vmatprep.subr.mxu0 0.0
    %196 = vmatpush2.msra.mxu0 0.0
    %197 = vmatprep.subr.mxu0 0.0
    %198 = vmatpush2.msra.mxu0 0.0
    %199 = vmatprep.subr.mxu0 0.0
    %200 = vmatpush2.msra.mxu0 0.0
    %201 = vmatprep.subr.mxu0 0.0
    %202 = vmatpush2.msra.mxu0 0.0
    %203 = vmatprep.subr.mxu0 0.0
    %204 = vmatpush2.msra.mxu0 0.0
    %205 = vmatprep.subr.mxu0 0.0
    %206 = vmatpush2.msra.mxu0 0.0
    %207 = vmatprep.subr.mxu0 0.0
    %208 = vmatpush2.msra.mxu0 0.0
    %209 = vmatprep.subr.mxu0 0.0
    %210 = vmatpush2.msra.mxu0 0.0
    %211 = vmatprep.subr.mxu0 0.0
    %212 = vmatpush2.msra.mxu0 0.0
    %213 = vmatprep.subr.mxu0 0.0
    %214 = vmatpush2.msra.mxu0 0.0
    %215 = vmatprep.subr.mxu0 0.0
    %216 = vmatpush2.msra.mxu0 0.0
    %217 = vmatprep.mubr.f32.mxu0 0.0
    %218 = vmatmul.mubr.f32.gmra.mxu0 %v151
    %v219 = vpop.f32.mrf.mxu0
    %v220 = vadd.f32 0.0, %v219
    %v221 = vpop.f32.mrf.mxu0
    %222 = vdwg.mxu0
    %v223 = vadd.f32 %v144, %v220
    %v224 = vxor.u32 %v223, 2147483648
    %v225 = vmul.f32 %v224, 1.442695
    %v226 = vpow.pop %v225
    %v227 = vadd.f32 %v226, 1.0
    %v228 = vrcp.pop %v227
    %v229 = vmul.f32 1.0, %v228
    %v230 = vtanh.pop %v223
    %232 = vrot.lane.b32.xlu0 %v148, 32
    %v233 = vpop.permute.xlu0 %232
    %v235 = vmul.f32 %v229, %v233
    %237 = vrot.lane.b32.xlu0 %v230, 64
    %v238 = vpop.permute.xlu0 %237
    %v240 = vmul.f32 %v229, %v238
    %242 = vrot.lane.b32.xlu0 %v240, 32
    %v243 = vpop.permute.xlu0 %242
    %v245 = vadd.f32 %v235, %v243
    %v246 = vtanh.pop %v245
    %248 = vrot.lane.b32.xlu0 %v246, 64
    %v249 = vpop.permute.xlu0 %248
    %v251 = vmul.f32 %v229, %v249
    %v252 = vtanh.pop %v251
    %254 = vrot.lane.b32.xlu0 %v251, 32
    %v255 = vpop.permute.xlu0 %254
    %v256 = vsel %vm149, %v255, 0
    %258 = vmatprep.subr.mxu0 0.0
    %259 = vmatpush1.msra.mxu0 0.0
    %260 = vmatprep.subr.mxu0 0.0
    %261 = vmatpush1.msra.mxu0 0.0
    %262 = vmatprep.subr.mxu0 0.0
    %263 = vmatpush1.msra.mxu0 0.0
    %264 = vmatprep.subr.mxu0 0.0
    %265 = vmatpush1.msra.mxu0 0.0
    %266 = vmatprep.subr.mxu0 0.0
    %267 = vmatpush1.msra.mxu0 0.0
    %268 = vmatprep.subr.mxu0 0.0
    %269 = vmatpush1.msra.mxu0 0.0
    %270 = vmatprep.subr.mxu0 0.0
    %271 = vmatpush1.msra.mxu0 0.0
    %272 = vmatprep.subr.mxu0 0.0
    %273 = vmatpush1.msra.mxu0 0.0
    %274 = vmatprep.subr.mxu0 0.0
    %275 = vmatpush1.msra.mxu0 0.0
    %276 = vmatprep.subr.mxu0 0.0
    %277 = vmatpush1.msra.mxu0 0.0
    %278 = vmatprep.subr.mxu0 0.0
    %279 = vmatpush1.msra.mxu0 0.0
    %280 = vmatprep.subr.mxu0 0.0
    %281 = vmatpush1.msra.mxu0 0.0
    %282 = vmatprep.subr.mxu0 0.0
    %283 = vmatpush1.msra.mxu0 %v67
    %284 = vmatprep.subr.mxu0 0.0
    %285 = vmatpush1.msra.mxu0 %v66
    %286 = vmatprep.subr.mxu0 0.0
    %287 = vmatpush1.msra.mxu0 %v65
    %288 = vmatprep.subr.mxu0 0.0
    %289 = vmatpush1.msra.mxu0 %v64
    %290 = vmatprep.subr.mxu0 0.0
    %291 = vmatpush2.msra.mxu0 0.0
    %292 = vmatprep.subr.mxu0 0.0
    %293 = vmatpush2.msra.mxu0 0.0
    %294 = vmatprep.subr.mxu0 0.0
    %295 = vmatpush2.msra.mxu0 0.0
    %296 = vmatprep.subr.mxu0 0.0
    %297 = vmatpush2.msra.mxu0 0.0
    %298 = vmatprep.subr.mxu0 0.0
    %299 = vmatpush2.msra.mxu0 0.0
    %300 = vmatprep.subr.mxu0 0.0
    %301 = vmatpush2.msra.mxu0 0.0
    %302 = vmatprep.subr.mxu0 0.0
    %303 = vmatpush2.msra.mxu0 0.0
    %304 = vmatprep.subr.mxu0 0.0
    %305 = vmatpush2.msra.mxu0 0.0
    %306 = vmatprep.subr.mxu0 0.0
    %307 = vmatpush2.msra.mxu0 0.0
    %308 = vmatprep.subr.mxu0 0.0
    %309 = vmatpush2.msra.mxu0 0.0
    %310 = vmatprep.subr.mxu0 0.0
    %311 = vmatpush2.msra.mxu0 0.0
    %312 = vmatprep.subr.mxu0 0.0
    %313 = vmatpush2.msra.mxu0 0.0
    %314 = vmatprep.subr.mxu0 0.0
    %315 = vmatpush2.msra.mxu0 0.0
    %316 = vmatprep.subr.mxu0 0.0
    %317 = vmatpush2.msra.mxu0 0.0
    %318 = vmatprep.subr.mxu0 0.0
    %319 = vmatpush2.msra.mxu0 0.0
    %320 = vmatprep.subr.mxu0 0.0
    %321 = vmatpush2.msra.mxu0 0.0
    %322 = vmatprep.mubr.f32.mxu0 0.0
    %323 = vmatmul.mubr.f32.gmra.mxu0 %v256
    %v324 = vpop.f32.mrf.mxu0
    %v325 = vadd.f32 0.0, %v324
    %v326 = vpop.f32.mrf.mxu0
    %327 = vdwg.mxu0
    %v329 = vrot.slane %v325, 7
    %v331 = vadd.f32 %v144, %v329
    %v332 = vxor.u32 %v331, 2147483648
    %v333 = vmul.f32 %v332, 1.442695
    %v334 = vpow.pop %v333
    %v335 = vadd.f32 %v334, 1.0
    %v336 = vrcp.pop %v335
    %v337 = vmul.f32 1.0, %v336
    %v338 = vtanh.pop %v331
    %v340 = vrot.slane %v245, 7
    %v342 = vmul.f32 %v337, %v340
    %344 = vrot.lane.b32.xlu0 %v338, 64
    %v345 = vpop.permute.xlu0 %344
    %v347 = vmul.f32 %v337, %v345
    %349 = vrot.lane.b32.xlu0 %v347, 32
    %v350 = vpop.permute.xlu0 %349
    %v352 = vadd.f32 %v342, %v350
    %v353 = vtanh.pop %v352
    %355 = vrot.lane.b32.xlu0 %v353, 64
    %v356 = vpop.permute.xlu0 %355
    %v358 = vmul.f32 %v337, %v356
    %v359 = vtanh.pop %v358
    %v361 = vrot.slane %v358, 1
    %362 = vrot.lane.b32.xlu0 %v361, 32
    %v363 = vpop.permute.xlu0 %362
    %v364 = vsel %vm149, %v363, 0
    %366 = vmatprep.subr.mxu0 0.0
    %367 = vmatpush1.msra.mxu0 0.0
    %368 = vmatprep.subr.mxu0 0.0
    %369 = vmatpush1.msra.mxu0 0.0
    %370 = vmatprep.subr.mxu0 0.0
    %371 = vmatpush1.msra.mxu0 0.0
    %372 = vmatprep.subr.mxu0 0.0
    %373 = vmatpush1.msra.mxu0 0.0
    %374 = vmatprep.subr.mxu0 0.0
    %375 = vmatpush1.msra.mxu0 0.0
    %376 = vmatprep.subr.mxu0 0.0
    %377 = vmatpush1.msra.mxu0 0.0
    %378 = vmatprep.subr.mxu0 0.0
    %379 = vmatpush1.msra.mxu0 0.0
    %380 = vmatprep.subr.mxu0 0.0
    %381 = vmatpush1.msra.mxu0 0.0
    %382 = vmatprep.subr.mxu0 0.0
    %383 = vmatpush1.msra.mxu0 0.0
    %384 = vmatprep.subr.mxu0 0.0
    %385 = vmatpush1.msra.mxu0 0.0
    %386 = vmatprep.subr.mxu0 0.0
    %387 = vmatpush1.msra.mxu0 0.0
    %388 = vmatprep.subr.mxu0 0.0
    %389 = vmatpush1.msra.mxu0 0.0
    %390 = vmatprep.subr.mxu0 0.0
    %391 = vmatpush1.msra.mxu0 %v67
    %392 = vmatprep.subr.mxu0 0.0
    %393 = vmatpush1.msra.mxu0 %v66
    %394 = vmatprep.subr.mxu0 0.0
    %395 = vmatpush1.msra.mxu0 %v65
    %396 = vmatprep.subr.mxu0 0.0
    %397 = vmatpush1.msra.mxu0 %v64
    %398 = vmatprep.subr.mxu0 0.0
    %399 = vmatpush2.msra.mxu0 0.0
    %400 = vmatprep.subr.mxu0 0.0
    %401 = vmatpush2.msra.mxu0 0.0
    %402 = vmatprep.subr.mxu0 0.0
    %403 = vmatpush2.msra.mxu0 0.0
    %404 = vmatprep.subr.mxu0 0.0
    %405 = vmatpush2.msra.mxu0 0.0
    %406 = vmatprep.subr.mxu0 0.0
    %407 = vmatpush2.msra.mxu0 0.0
    %408 = vmatprep.subr.mxu0 0.0
    %409 = vmatpush2.msra.mxu0 0.0
    %410 = vmatprep.subr.mxu0 0.0
    %411 = vmatpush2.msra.mxu0 0.0
    %412 = vmatprep.subr.mxu0 0.0
    %413 = vmatpush2.msra.mxu0 0.0
    %414 = vmatprep.subr.mxu0 0.0
    %415 = vmatpush2.msra.mxu0 0.0
    %416 = vmatprep.subr.mxu0 0.0
    %417 = vmatpush2.msra.mxu0 0.0
    %418 = vmatprep.subr.mxu0 0.0
    %419 = vmatpush2.msra.mxu0 0.0
    %420 = vmatprep.subr.mxu0 0.0
    %421 = vmatpush2.msra.mxu0 0.0
    %422 = vmatprep.subr.mxu0 0.0
    %423 = vmatpush2.msra.mxu0 0.0
    %424 = vmatprep.subr.mxu0 0.0
    %425 = vmatpush2.msra.mxu0 0.0
    %426 = vmatprep.subr.mxu0 0.0
    %427 = vmatpush2.msra.mxu0 0.0
    %428 = vmatprep.subr.mxu0 0.0
    %429 = vmatpush2.msra.mxu0 0.0
    %430 = vmatprep.mubr.f32.mxu0 0.0
    %431 = vmatmul.mubr.f32.gmra.mxu0 %v364
    %v432 = vpop.f32.mrf.mxu0
    %v433 = vadd.f32 0.0, %v432
    %v434 = vpop.f32.mrf.mxu0
    %435 = vdwg.mxu0
    %v437 = vrot.slane %v433, 6
    %v439 = vadd.f32 %v144, %v437
    %v440 = vxor.u32 %v439, 2147483648
    %v441 = vmul.f32 %v440, 1.442695
    %v442 = vpow.pop %v441
    %v443 = vadd.f32 %v442, 1.0
    %v444 = vrcp.pop %v443
    %v445 = vmul.f32 1.0, %v444
    %v446 = vtanh.pop %v439
    %v448 = vrot.slane %v352, 7
    %v450 = vmul.f32 %v445, %v448
    %452 = vrot.lane.b32.xlu0 %v446, 64
    %v453 = vpop.permute.xlu0 %452
    %v455 = vmul.f32 %v445, %v453
    %457 = vrot.lane.b32.xlu0 %v455, 32
    %v458 = vpop.permute.xlu0 %457
    %v460 = vadd.f32 %v450, %v458
    %v461 = vtanh.pop %v460
    %463 = vrot.lane.b32.xlu0 %v461, 64
    %v464 = vpop.permute.xlu0 %463
    %v466 = vmul.f32 %v445, %v464
    %v467 = vtanh.pop %v466
    %v469 = vrot.slane %v466, 2
    %470 = vrot.lane.b32.xlu0 %v469, 32
    %v471 = vpop.permute.xlu0 %470
    %v472 = vsel %vm149, %v471, 0
    %474 = vmatprep.subr.mxu0 0.0
    %475 = vmatpush1.msra.mxu0 0.0
    %476 = vmatprep.subr.mxu0 0.0
    %477 = vmatpush1.msra.mxu0 0.0
    %478 = vmatprep.subr.mxu0 0.0
    %479 = vmatpush1.msra.mxu0 0.0
    %480 = vmatprep.subr.mxu0 0.0
    %481 = vmatpush1.msra.mxu0 0.0
    %482 = vmatprep.subr.mxu0 0.0
    %483 = vmatpush1.msra.mxu0 0.0
    %484 = vmatprep.subr.mxu0 0.0
    %485 = vmatpush1.msra.mxu0 0.0
    %486 = vmatprep.subr.mxu0 0.0
    %487 = vmatpush1.msra.mxu0 0.0
    %488 = vmatprep.subr.mxu0 0.0
    %489 = vmatpush1.msra.mxu0 0.0
    %490 = vmatprep.subr.mxu0 0.0
    %491 = vmatpush1.msra.mxu0 0.0
    %492 = vmatprep.subr.mxu0 0.0
    %493 = vmatpush1.msra.mxu0 0.0
    %494 = vmatprep.subr.mxu0 0.0
    %495 = vmatpush1.msra.mxu0 0.0
    %496 = vmatprep.subr.mxu0 0.0
    %497 = vmatpush1.msra.mxu0 0.0
    %498 = vmatprep.subr.mxu0 0.0
    %499 = vmatpush1.msra.mxu0 %v67
    %500 = vmatprep.subr.mxu0 0.0
    %501 = vmatpush1.msra.mxu0 %v66
    %502 = vmatprep.subr.mxu0 0.0
    %503 = vmatpush1.msra.mxu0 %v65
    %504 = vmatprep.subr.mxu0 0.0
    %505 = vmatpush1.msra.mxu0 %v64
    %506 = vmatprep.subr.mxu0 0.0
    %507 = vmatpush2.msra.mxu0 0.0
    %508 = vmatprep.subr.mxu0 0.0
    %509 = vmatpush2.msra.mxu0 0.0
    %510 = vmatprep.subr.mxu0 0.0
    %511 = vmatpush2.msra.mxu0 0.0
    %512 = vmatprep.subr.mxu0 0.0
    %513 = vmatpush2.msra.mxu0 0.0
    %514 = vmatprep.subr.mxu0 0.0
    %515 = vmatpush2.msra.mxu0 0.0
    %516 = vmatprep.subr.mxu0 0.0
    %517 = vmatpush2.msra.mxu0 0.0
    %518 = vmatprep.subr.mxu0 0.0
    %519 = vmatpush2.msra.mxu0 0.0
    %520 = vmatprep.subr.mxu0 0.0
    %521 = vmatpush2.msra.mxu0 0.0
    %522 = vmatprep.subr.mxu0 0.0
    %523 = vmatpush2.msra.mxu0 0.0
    %524 = vmatprep.subr.mxu0 0.0
    %525 = vmatpush2.msra.mxu0 0.0
    %526 = vmatprep.subr.mxu0 0.0
    %527 = vmatpush2.msra.mxu0 0.0
    %528 = vmatprep.subr.mxu0 0.0
    %529 = vmatpush2.msra.mxu0 0.0
    %530 = vmatprep.subr.mxu0 0.0
    %531 = vmatpush2.msra.mxu0 0.0
    %532 = vmatprep.subr.mxu0 0.0
    %533 = vmatpush2.msra.mxu0 0.0
    %534 = vmatprep.subr.mxu0 0.0
    %535 = vmatpush2.msra.mxu0 0.0
    %536 = vmatprep.subr.mxu0 0.0
    %537 = vmatpush2.msra.mxu0 0.0
    %538 = vmatprep.mubr.f32.mxu0 0.0
    %539 = vmatmul.mubr.f32.gmra.mxu0 %v472
    %v540 = vpop.f32.mrf.mxu0
    %v541 = vadd.f32 0.0, %v540
    %v542 = vpop.f32.mrf.mxu0
    %543 = vdwg.mxu0
    %v545 = vrot.slane %v541, 5
    %v547 = vadd.f32 %v144, %v545
    %v548 = vxor.u32 %v547, 2147483648
    %v549 = vmul.f32 %v548, 1.442695
    %v550 = vpow.pop %v549
    %v551 = vadd.f32 %v550, 1.0
    %v552 = vrcp.pop %v551
    %v553 = vmul.f32 1.0, %v552
    %v554 = vtanh.pop %v547
    %v556 = vrot.slane %v460, 7
    %v558 = vmul.f32 %v553, %v556
    %560 = vrot.lane.b32.xlu0 %v554, 64
    %v561 = vpop.permute.xlu0 %560
    %v563 = vmul.f32 %v553, %v561
    %565 = vrot.lane.b32.xlu0 %v563, 32
    %v566 = vpop.permute.xlu0 %565
    %v568 = vadd.f32 %v558, %v566
    %v569 = vtanh.pop %v568
    %571 = vrot.lane.b32.xlu0 %v569, 64
    %v572 = vpop.permute.xlu0 %571
    %v574 = vmul.f32 %v553, %v572
    %v575 = vtanh.pop %v574
    %v577 = vrot.slane %v574, 3
    %578 = vrot.lane.b32.xlu0 %v577, 32
    %v579 = vpop.permute.xlu0 %578
    %v580 = vsel %vm149, %v579, 0
    %582 = vmatprep.subr.mxu0 0.0
    %583 = vmatpush1.msra.mxu0 0.0
    %584 = vmatprep.subr.mxu0 0.0
    %585 = vmatpush1.msra.mxu0 0.0
    %586 = vmatprep.subr.mxu0 0.0
    %587 = vmatpush1.msra.mxu0 0.0
    %588 = vmatprep.subr.mxu0 0.0
    %589 = vmatpush1.msra.mxu0 0.0
    %590 = vmatprep.subr.mxu0 0.0
    %591 = vmatpush1.msra.mxu0 0.0
    %592 = vmatprep.subr.mxu0 0.0
    %593 = vmatpush1.msra.mxu0 0.0
    %594 = vmatprep.subr.mxu0 0.0
    %595 = vmatpush1.msra.mxu0 0.0
    %596 = vmatprep.subr.mxu0 0.0
    %597 = vmatpush1.msra.mxu0 0.0
    %598 = vmatprep.subr.mxu0 0.0
    %599 = vmatpush1.msra.mxu0 0.0
    %600 = vmatprep.subr.mxu0 0.0
    %601 = vmatpush1.msra.mxu0 0.0
    %602 = vmatprep.subr.mxu0 0.0
    %603 = vmatpush1.msra.mxu0 0.0
    %604 = vmatprep.subr.mxu0 0.0
    %605 = vmatpush1.msra.mxu0 0.0
    %606 = vmatprep.subr.mxu0 0.0
    %607 = vmatpush1.msra.mxu0 %v67
    %608 = vmatprep.subr.mxu0 0.0
    %609 = vmatpush1.msra.mxu0 %v66
    %610 = vmatprep.subr.mxu0 0.0
    %611 = vmatpush1.msra.mxu0 %v65
    %612 = vmatprep.subr.mxu0 0.0
    %613 = vmatpush1.msra.mxu0 %v64
    %614 = vmatprep.subr.mxu0 0.0
    %615 = vmatpush2.msra.mxu0 0.0
    %616 = vmatprep.subr.mxu0 0.0
    %617 = vmatpush2.msra.mxu0 0.0
    %618 = vmatprep.subr.mxu0 0.0
    %619 = vmatpush2.msra.mxu0 0.0
    %620 = vmatprep.subr.mxu0 0.0
    %621 = vmatpush2.msra.mxu0 0.0
    %622 = vmatprep.subr.mxu0 0.0
    %623 = vmatpush2.msra.mxu0 0.0
    %624 = vmatprep.subr.mxu0 0.0
    %625 = vmatpush2.msra.mxu0 0.0
    %626 = vmatprep.subr.mxu0 0.0
    %627 = vmatpush2.msra.mxu0 0.0
    %628 = vmatprep.subr.mxu0 0.0
    %629 = vmatpush2.msra.mxu0 0.0
    %630 = vmatprep.subr.mxu0 0.0
    %631 = vmatpush2.msra.mxu0 0.0
    %632 = vmatprep.subr.mxu0 0.0
    %633 = vmatpush2.msra.mxu0 0.0
    %634 = vmatprep.subr.mxu0 0.0
    %635 = vmatpush2.msra.mxu0 0.0
    %636 = vmatprep.subr.mxu0 0.0
    %637 = vmatpush2.msra.mxu0 0.0
    %638 = vmatprep.subr.mxu0 0.0
    %639 = vmatpush2.msra.mxu0 0.0
    %640 = vmatprep.subr.mxu0 0.0
    %641 = vmatpush2.msra.mxu0 0.0
    %642 = vmatprep.subr.mxu0 0.0
    %643 = vmatpush2.msra.mxu0 0.0
    %644 = vmatprep.subr.mxu0 0.0
    %645 = vmatpush2.msra.mxu0 0.0
    %646 = vmatprep.mubr.f32.mxu0 0.0
    %647 = vmatmul.mubr.f32.gmra.mxu0 %v580
    %v648 = vpop.f32.mrf.mxu0
    %v649 = vadd.f32 0.0, %v648
    %v650 = vpop.f32.mrf.mxu0
    %651 = vdwg.mxu0
    %v653 = vrot.slane %v649, 4
    %v655 = vadd.f32 %v144, %v653
    %v656 = vxor.u32 %v655, 2147483648
    %v657 = vmul.f32 %v656, 1.442695
    %v658 = vpow.pop %v657
    %v659 = vadd.f32 %v658, 1.0
    %v660 = vrcp.pop %v659
    %v661 = vmul.f32 1.0, %v660
    %v662 = vtanh.pop %v655
    %v664 = vrot.slane %v568, 7
    %v666 = vmul.f32 %v661, %v664
    %668 = vrot.lane.b32.xlu0 %v662, 64
    %v669 = vpop.permute.xlu0 %668
    %v671 = vmul.f32 %v661, %v669
    %673 = vrot.lane.b32.xlu0 %v671, 32
    %v674 = vpop.permute.xlu0 %673
    %v676 = vadd.f32 %v666, %v674
    %v677 = vtanh.pop %v676
    %679 = vrot.lane.b32.xlu0 %v677, 64
    %v680 = vpop.permute.xlu0 %679
    %v682 = vmul.f32 %v661, %v680
    %v683 = vtanh.pop %v682
    %v685 = vrot.slane %v682, 4
    %686 = vrot.lane.b32.xlu0 %v685, 32
    %v687 = vpop.permute.xlu0 %686
    %v688 = vsel %vm149, %v687, 0
    %690 = vmatprep.subr.mxu0 0.0
    %691 = vmatpush1.msra.mxu0 0.0
    %692 = vmatprep.subr.mxu0 0.0
    %693 = vmatpush1.msra.mxu0 0.0
    %694 = vmatprep.subr.mxu0 0.0
    %695 = vmatpush1.msra.mxu0 0.0
    %696 = vmatprep.subr.mxu0 0.0
    %697 = vmatpush1.msra.mxu0 0.0
    %698 = vmatprep.subr.mxu0 0.0
    %699 = vmatpush1.msra.mxu0 0.0
    %700 = vmatprep.subr.mxu0 0.0
    %701 = vmatpush1.msra.mxu0 0.0
    %702 = vmatprep.subr.mxu0 0.0
    %703 = vmatpush1.msra.mxu0 0.0
    %704 = vmatprep.subr.mxu0 0.0
    %705 = vmatpush1.msra.mxu0 0.0
    %706 = vmatprep.subr.mxu0 0.0
    %707 = vmatpush1.msra.mxu0 0.0
    %708 = vmatprep.subr.mxu0 0.0
    %709 = vmatpush1.msra.mxu0 0.0
    %710 = vmatprep.subr.mxu0 0.0
    %711 = vmatpush1.msra.mxu0 0.0
    %712 = vmatprep.subr.mxu0 0.0
    %713 = vmatpush1.msra.mxu0 0.0
    %714 = vmatprep.subr.mxu0 0.0
    %715 = vmatpush1.msra.mxu0 %v67
    %716 = vmatprep.subr.mxu0 0.0
    %717 = vmatpush1.msra.mxu0 %v66
    %718 = vmatprep.subr.mxu0 0.0
    %719 = vmatpush1.msra.mxu0 %v65
    %720 = vmatprep.subr.mxu0 0.0
    %721 = vmatpush1.msra.mxu0 %v64
    %722 = vmatprep.subr.mxu0 0.0
    %723 = vmatpush2.msra.mxu0 0.0
    %724 = vmatprep.subr.mxu0 0.0
    %725 = vmatpush2.msra.mxu0 0.0
    %726 = vmatprep.subr.mxu0 0.0
    %727 = vmatpush2.msra.mxu0 0.0
    %728 = vmatprep.subr.mxu0 0.0
    %729 = vmatpush2.msra.mxu0 0.0
    %730 = vmatprep.subr.mxu0 0.0
    %731 = vmatpush2.msra.mxu0 0.0
    %732 = vmatprep.subr.mxu0 0.0
    %733 = vmatpush2.msra.mxu0 0.0
    %734 = vmatprep.subr.mxu0 0.0
    %735 = vmatpush2.msra.mxu0 0.0
    %736 = vmatprep.subr.mxu0 0.0
    %737 = vmatpush2.msra.mxu0 0.0
    %738 = vmatprep.subr.mxu0 0.0
    %739 = vmatpush2.msra.mxu0 0.0
    %740 = vmatprep.subr.mxu0 0.0
    %741 = vmatpush2.msra.mxu0 0.0
    %742 = vmatprep.subr.mxu0 0.0
    %743 = vmatpush2.msra.mxu0 0.0
    %744 = vmatprep.subr.mxu0 0.0
    %745 = vmatpush2.msra.mxu0 0.0
    %746 = vmatprep.subr.mxu0 0.0
    %747 = vmatpush2.msra.mxu0 0.0
    %748 = vmatprep.subr.mxu0 0.0
    %749 = vmatpush2.msra.mxu0 0.0
    %750 = vmatprep.subr.mxu0 0.0
    %751 = vmatpush2.msra.mxu0 0.0
    %752 = vmatprep.subr.mxu0 0.0
    %753 = vmatpush2.msra.mxu0 0.0
    %754 = vmatprep.mubr.f32.mxu0 0.0
    %755 = vmatmul.mubr.f32.gmra.mxu0 %v688
    %v756 = vpop.f32.mrf.mxu0
    %v757 = vadd.f32 0.0, %v756
    %v758 = vpop.f32.mrf.mxu0
    %759 = vdwg.mxu0
    %v761 = vrot.slane %v757, 3
    %v763 = vadd.f32 %v144, %v761
    %v764 = vxor.u32 %v763, 2147483648
    %v765 = vmul.f32 %v764, 1.442695
    %v766 = vpow.pop %v765
    %v767 = vadd.f32 %v766, 1.0
    %v768 = vrcp.pop %v767
    %v769 = vmul.f32 1.0, %v768
    %v770 = vtanh.pop %v763
    %v772 = vrot.slane %v676, 7
    %v774 = vmul.f32 %v769, %v772
    %776 = vrot.lane.b32.xlu0 %v770, 64
    %v777 = vpop.permute.xlu0 %776
    %v779 = vmul.f32 %v769, %v777
    %781 = vrot.lane.b32.xlu0 %v779, 32
    %v782 = vpop.permute.xlu0 %781
    %v784 = vadd.f32 %v774, %v782
    %v785 = vtanh.pop %v784
    %787 = vrot.lane.b32.xlu0 %v785, 64
    %v788 = vpop.permute.xlu0 %787
    %v790 = vmul.f32 %v769, %v788
    %v791 = vtanh.pop %v790
    %v793 = vrot.slane %v790, 5
    %794 = vrot.lane.b32.xlu0 %v793, 32
    %v795 = vpop.permute.xlu0 %794
    %v796 = vsel %vm149, %v795, 0
    %798 = vmatprep.subr.mxu0 0.0
    %799 = vmatpush1.msra.mxu0 0.0
    %800 = vmatprep.subr.mxu0 0.0
    %801 = vmatpush1.msra.mxu0 0.0
    %802 = vmatprep.subr.mxu0 0.0
    %803 = vmatpush1.msra.mxu0 0.0
    %804 = vmatprep.subr.mxu0 0.0
    %805 = vmatpush1.msra.mxu0 0.0
    %806 = vmatprep.subr.mxu0 0.0
    %807 = vmatpush1.msra.mxu0 0.0
    %808 = vmatprep.subr.mxu0 0.0
    %809 = vmatpush1.msra.mxu0 0.0
    %810 = vmatprep.subr.mxu0 0.0
    %811 = vmatpush1.msra.mxu0 0.0
    %812 = vmatprep.subr.mxu0 0.0
    %813 = vmatpush1.msra.mxu0 0.0
    %814 = vmatprep.subr.mxu0 0.0
    %815 = vmatpush1.msra.mxu0 0.0
    %816 = vmatprep.subr.mxu0 0.0
    %817 = vmatpush1.msra.mxu0 0.0
    %818 = vmatprep.subr.mxu0 0.0
    %819 = vmatpush1.msra.mxu0 0.0
    %820 = vmatprep.subr.mxu0 0.0
    %821 = vmatpush1.msra.mxu0 0.0
    %822 = vmatprep.subr.mxu0 0.0
    %823 = vmatpush1.msra.mxu0 %v67
    %824 = vmatprep.subr.mxu0 0.0
    %825 = vmatpush1.msra.mxu0 %v66
    %826 = vmatprep.subr.mxu0 0.0
    %827 = vmatpush1.msra.mxu0 %v65
    %828 = vmatprep.subr.mxu0 0.0
    %829 = vmatpush1.msra.mxu0 %v64
    %830 = vmatprep.subr.mxu0 0.0
    %831 = vmatpush2.msra.mxu0 0.0
    %832 = vmatprep.subr.mxu0 0.0
    %833 = vmatpush2.msra.mxu0 0.0
    %834 = vmatprep.subr.mxu0 0.0
    %835 = vmatpush2.msra.mxu0 0.0
    %836 = vmatprep.subr.mxu0 0.0
    %837 = vmatpush2.msra.mxu0 0.0
    %838 = vmatprep.subr.mxu0 0.0
    %839 = vmatpush2.msra.mxu0 0.0
    %840 = vmatprep.subr.mxu0 0.0
    %841 = vmatpush2.msra.mxu0 0.0
    %842 = vmatprep.subr.mxu0 0.0
    %843 = vmatpush2.msra.mxu0 0.0
    %844 = vmatprep.subr.mxu0 0.0
    %845 = vmatpush2.msra.mxu0 0.0
    %846 = vmatprep.subr.mxu0 0.0
    %847 = vmatpush2.msra.mxu0 0.0
    %848 = vmatprep.subr.mxu0 0.0
    %849 = vmatpush2.msra.mxu0 0.0
    %850 = vmatprep.subr.mxu0 0.0
    %851 = vmatpush2.msra.mxu0 0.0
    %852 = vmatprep.subr.mxu0 0.0
    %853 = vmatpush2.msra.mxu0 0.0
    %854 = vmatprep.subr.mxu0 0.0
    %855 = vmatpush2.msra.mxu0 0.0
    %856 = vmatprep.subr.mxu0 0.0
    %857 = vmatpush2.msra.mxu0 0.0
    %858 = vmatprep.subr.mxu0 0.0
    %859 = vmatpush2.msra.mxu0 0.0
    %860 = vmatprep.subr.mxu0 0.0
    %861 = vmatpush2.msra.mxu0 0.0
    %862 = vmatprep.mubr.f32.mxu0 0.0
    %863 = vmatmul.mubr.f32.gmra.mxu0 %v796
    %v864 = vpop.f32.mrf.mxu0
    %v865 = vadd.f32 0.0, %v864
    %v866 = vpop.f32.mrf.mxu0
    %867 = vdwg.mxu0
    %v869 = vrot.slane %v865, 2
    %v871 = vadd.f32 %v144, %v869
    %v872 = vxor.u32 %v871, 2147483648
    %v873 = vmul.f32 %v872, 1.442695
    %v874 = vpow.pop %v873
    %v875 = vadd.f32 %v874, 1.0
    %v876 = vrcp.pop %v875
    %v877 = vmul.f32 1.0, %v876
    %v878 = vtanh.pop %v871
    %v880 = vrot.slane %v784, 7
    %v882 = vmul.f32 %v877, %v880
    %884 = vrot.lane.b32.xlu0 %v878, 64
    %v885 = vpop.permute.xlu0 %884
    %v887 = vmul.f32 %v877, %v885
    %889 = vrot.lane.b32.xlu0 %v887, 32
    %v890 = vpop.permute.xlu0 %889
    %v892 = vadd.f32 %v882, %v890
    %v893 = vtanh.pop %v892
    %895 = vrot.lane.b32.xlu0 %v893, 64
    %v896 = vpop.permute.xlu0 %895
    %v898 = vmul.f32 %v877, %v896
    %v899 = vtanh.pop %v898
    %v901 = vrot.slane %v898, 6
    %902 = vrot.lane.b32.xlu0 %v901, 32
    %v903 = vpop.permute.xlu0 %902
    %v904 = vsel %vm149, %v903, 0
    %906 = vmatprep.subr.mxu0 0.0
    %907 = vmatpush1.msra.mxu0 0.0
    %908 = vmatprep.subr.mxu0 0.0
    %909 = vmatpush1.msra.mxu0 0.0
    %910 = vmatprep.subr.mxu0 0.0
    %911 = vmatpush1.msra.mxu0 0.0
    %912 = vmatprep.subr.mxu0 0.0
    %913 = vmatpush1.msra.mxu0 0.0
    %914 = vmatprep.subr.mxu0 0.0
    %915 = vmatpush1.msra.mxu0 0.0
    %916 = vmatprep.subr.mxu0 0.0
    %917 = vmatpush1.msra.mxu0 0.0
    %918 = vmatprep.subr.mxu0 0.0
    %919 = vmatpush1.msra.mxu0 0.0
    %920 = vmatprep.subr.mxu0 0.0
    %921 = vmatpush1.msra.mxu0 0.0
    %922 = vmatprep.subr.mxu0 0.0
    %923 = vmatpush1.msra.mxu0 0.0
    %924 = vmatprep.subr.mxu0 0.0
    %925 = vmatpush1.msra.mxu0 0.0
    %926 = vmatprep.subr.mxu0 0.0
    %927 = vmatpush1.msra.mxu0 0.0
    %928 = vmatprep.subr.mxu0 0.0
    %929 = vmatpush1.msra.mxu0 0.0
    %930 = vmatprep.subr.mxu0 0.0
    %931 = vmatpush1.msra.mxu0 %v67
    %932 = vmatprep.subr.mxu0 0.0
    %933 = vmatpush1.msra.mxu0 %v66
    %934 = vmatprep.subr.mxu0 0.0
    %935 = vmatpush1.msra.mxu0 %v65
    %936 = vmatprep.subr.mxu0 0.0
    %937 = vmatpush1.msra.mxu0 %v64
    %938 = vmatprep.subr.mxu0 0.0
    %939 = vmatpush2.msra.mxu0 0.0
    %940 = vmatprep.subr.mxu0 0.0
    %941 = vmatpush2.msra.mxu0 0.0
    %942 = vmatprep.subr.mxu0 0.0
    %943 = vmatpush2.msra.mxu0 0.0
    %944 = vmatprep.subr.mxu0 0.0
    %945 = vmatpush2.msra.mxu0 0.0
    %946 = vmatprep.subr.mxu0 0.0
    %947 = vmatpush2.msra.mxu0 0.0
    %948 = vmatprep.subr.mxu0 0.0
    %949 = vmatpush2.msra.mxu0 0.0
    %950 = vmatprep.subr.mxu0 0.0
    %951 = vmatpush2.msra.mxu0 0.0
    %952 = vmatprep.subr.mxu0 0.0
    %953 = vmatpush2.msra.mxu0 0.0
    %954 = vmatprep.subr.mxu0 0.0
    %955 = vmatpush2.msra.mxu0 0.0
    %956 = vmatprep.subr.mxu0 0.0
    %957 = vmatpush2.msra.mxu0 0.0
    %958 = vmatprep.subr.mxu0 0.0
    %959 = vmatpush2.msra.mxu0 0.0
    %960 = vmatprep.subr.mxu0 0.0
    %961 = vmatpush2.msra.mxu0 0.0
    %962 = vmatprep.subr.mxu0 0.0
    %963 = vmatpush2.msra.mxu0 0.0
    %964 = vmatprep.subr.mxu0 0.0
    %965 = vmatpush2.msra.mxu0 0.0
    %966 = vmatprep.subr.mxu0 0.0
    %967 = vmatpush2.msra.mxu0 0.0
    %968 = vmatprep.subr.mxu0 0.0
    %969 = vmatpush2.msra.mxu0 0.0
    %970 = vmatprep.mubr.f32.mxu0 0.0
    %971 = vmatmul.mubr.f32.gmra.mxu0 %v904
    %v972 = vpop.f32.mrf.mxu0
    %v973 = vadd.f32 0.0, %v972
    %v974 = vpop.f32.mrf.mxu0
    %975 = vdwg.mxu0
    %v977 = vrot.slane %v973, 1
    %v979 = vadd.f32 %v144, %v977
    %v980 = vxor.u32 %v979, 2147483648
    %v981 = vmul.f32 %v980, 1.442695
    %v982 = vpow.pop %v981
    %v983 = vadd.f32 %v982, 1.0
    %v984 = vrcp.pop %v983
    %v985 = vmul.f32 1.0, %v984
    %v986 = vtanh.pop %v979
    %v988 = vrot.slane %v892, 7
    %v990 = vmul.f32 %v985, %v988
    %992 = vrot.lane.b32.xlu0 %v986, 64
    %v993 = vpop.permute.xlu0 %992
    %v995 = vmul.f32 %v985, %v993
    %997 = vrot.lane.b32.xlu0 %v995, 32
    %v998 = vpop.permute.xlu0 %997
    %v1000 = vadd.f32 %v990, %v998
    %v1001 = vtanh.pop %v1000
    %1003 = vrot.lane.b32.xlu0 %v1001, 64
    %v1004 = vpop.permute.xlu0 %1003
    %v1006 = vmul.f32 %v985, %v1004
    %v1007 = vtanh.pop %v1006
    %vm1008 = vcmask 1040384
    %v1009 = vsel %vm1008, %v252, %v359
    %vm1010 = vcmask 1041408
    %v1011 = vsel %vm1010, %v1009, %v467
    %vm1012 = vcmask 1042432
    %v1013 = vsel %vm1012, %v1011, %v575
    %vm1014 = vcmask 1043456
    %v1015 = vsel %vm1014, %v1013, %v683
    %vm1016 = vcmask 1044480
    %v1017 = vsel %vm1016, %v1015, %v791
    %vm1018 = vcmask 1045504
    %v1019 = vsel %vm1018, %v1017, %v899
    %vm1020 = vcmask 1046528
    %v1021 = vsel %vm1020, %v1019, %v1007
    %v1022 = vld [vmem:[%s3] sm:$0xff]
    %v1023 = vld [vmem:[%s3 + $0x8] sm:$0xff]
    %v1024 = vld [vmem:[%s3 + $0x10] sm:$0xff]
    %v1025 = vld [vmem:[%s3 + $0x18] sm:$0xff]
    %v1026 = vld [vmem:[#allocation6 + $0x1] sm:$0x1]
    %v1027 = vlaneseq
    %v1028 = vshrl.u32 %v1027, 7
    %v1029 = vsub.s32 0, %v1028
    %v1030 = vrot.slane %v1026, %v1029
    %1032 = vrot.lane.b32.xlu0 %v1021, 32
    %v1033 = vpop.permute.xlu0 %1032
    %v1034 = vsel %vm149, %v1033, 0
    %1036 = vmatprep.subr.mxu0 0.0
    %1037 = vmatpush1.msra.mxu0 0.0
    %1038 = vmatprep.subr.mxu0 0.0
    %1039 = vmatpush1.msra.mxu0 0.0
    %1040 = vmatprep.subr.mxu0 0.0
    %1041 = vmatpush1.msra.mxu0 0.0
    %1042 = vmatprep.subr.mxu0 0.0
    %1043 = vmatpush1.msra.mxu0 0.0
    %1044 = vmatprep.subr.mxu0 0.0
    %1045 = vmatpush1.msra.mxu0 0.0
    %1046 = vmatprep.subr.mxu0 0.0
    %1047 = vmatpush1.msra.mxu0 0.0
    %1048 = vmatprep.subr.mxu0 0.0
    %1049 = vmatpush1.msra.mxu0 0.0
    %1050 = vmatprep.subr.mxu0 0.0
    %1051 = vmatpush1.msra.mxu0 0.0
    %1052 = vmatprep.subr.mxu0 0.0
    %1053 = vmatpush1.msra.mxu0 0.0
    %1054 = vmatprep.subr.mxu0 0.0
    %1055 = vmatpush1.msra.mxu0 0.0
    %1056 = vmatprep.subr.mxu0 0.0
    %1057 = vmatpush1.msra.mxu0 0.0
    %1058 = vmatprep.subr.mxu0 0.0
    %1059 = vmatpush1.msra.mxu0 0.0
    %1060 = vmatprep.subr.mxu0 0.0
    %1061 = vmatpush1.msra.mxu0 %v1025
    %1062 = vmatprep.subr.mxu0 0.0
    %1063 = vmatpush1.msra.mxu0 %v1024
    %1064 = vmatprep.subr.mxu0 0.0
    %1065 = vmatpush1.msra.mxu0 %v1023
    %1066 = vmatprep.subr.mxu0 0.0
    %1067 = vmatpush1.msra.mxu0 %v1022
    %1068 = vmatprep.subr.mxu0 0.0
    %1069 = vmatpush2.msra.mxu0 0.0
    %1070 = vmatprep.subr.mxu0 0.0
    %1071 = vmatpush2.msra.mxu0 0.0
    %1072 = vmatprep.subr.mxu0 0.0
    %1073 = vmatpush2.msra.mxu0 0.0
    %1074 = vmatprep.subr.mxu0 0.0
    %1075 = vmatpush2.msra.mxu0 0.0
    %1076 = vmatprep.subr.mxu0 0.0
    %1077 = vmatpush2.msra.mxu0 0.0
    %1078 = vmatprep.subr.mxu0 0.0
    %1079 = vmatpush2.msra.mxu0 0.0
    %1080 = vmatprep.subr.mxu0 0.0
    %1081 = vmatpush2.msra.mxu0 0.0
    %1082 = vmatprep.subr.mxu0 0.0
    %1083 = vmatpush2.msra.mxu0 0.0
    %1084 = vmatprep.subr.mxu0 0.0
    %1085 = vmatpush2.msra.mxu0 0.0
    %1086 = vmatprep.subr.mxu0 0.0
    %1087 = vmatpush2.msra.mxu0 0.0
    %1088 = vmatprep.subr.mxu0 0.0
    %1089 = vmatpush2.msra.mxu0 0.0
    %1090 = vmatprep.subr.mxu0 0.0
    %1091 = vmatpush2.msra.mxu0 0.0
    %1092 = vmatprep.subr.mxu0 0.0
    %1093 = vmatpush2.msra.mxu0 0.0
    %1094 = vmatprep.subr.mxu0 0.0
    %1095 = vmatpush2.msra.mxu0 0.0
    %1096 = vmatprep.subr.mxu0 0.0
    %1097 = vmatpush2.msra.mxu0 0.0
    %1098 = vmatprep.subr.mxu0 0.0
    %1099 = vmatpush2.msra.mxu0 0.0
    %1100 = vmatprep.mubr.f32.mxu0 0.0
    %1101 = vmatmul.mubr.f32.gmra.mxu0 %v1034
    %v1102 = vpop.f32.mrf.mxu0
    %v1103 = vadd.f32 %v1030, %v1102
    %v1104 = vpop.f32.mrf.mxu0
    %1105 = vdwg.mxu0
    %1106 = vst [vmem:[#allocation7] sm:$0xff] %v1103
    %1108 = vrot.lane.b32.xlu0 %v1006, 32
    %v1109 = vpop.permute.xlu0 %1108
    %vm1111 = vcmask 261127
    %1112 = vst.msk [vmem:[%s7 - $0x7] sm:$0x80] %vm1111, %v1109
    %1114 = vrot.lane.b32.xlu0 %v1000, 96
    %v1115 = vpop.permute.xlu0 %1114
    %1117 = vst.msk [vmem:[%s7 - $0x6] sm:$0x80] %vm1111, %v1115
    // Predicated region
    $region34: #{simple_model2_forward_seq.1} parent=1 // pred_check
      _
    $region35: #{simple_model2_forward_seq.1} parent=1 // pred_check_branch
      %1119 = sbr.rel (0) target = $region37
    $region36: #{simple_model2_forward_seq.1} parent=1 // pred_region
      %s1121 = ssub.s32 128, 128
      %1122 = vsyncadd [#allocation4], %s1121
      %s1124 = sshll.u32 [#allocation7], 4
      %s1125 = int_to_ptr.vmem [resolvable:$true] %s1124
      %1127 = dma.vmem_to_hbm [thread:$0]  %s1125, 128, %s6, [#allocation4]
    $region37: #{simple_model2_forward_seq.1} parent=1 // pred_fallthru
      _
    // Predicated region
    $region38: #{simple_model2_forward_seq.1} parent=1 // pred_check
      _
    $region39: #{simple_model2_forward_seq.1} parent=1 // pred_check_branch
      %1129 = sbr.rel (0) target = $region41
    $region40: #{simple_model2_forward_seq.1} parent=1 // pred_region
      _
    $region41: #{simple_model2_forward_seq.1} parent=1 // pred_fallthru
      _
    // Predicated region
    $region42: #{simple_model2_forward_seq.1} parent=1 // pred_check
      _
    $region43: #{simple_model2_forward_seq.1} parent=1 // pred_check_branch
      %1131 = sbr.rel (0) target = $region45
    $region44: #{simple_model2_forward_seq.1} parent=1 // pred_region
      %1132 = dma.done [#allocation4], 128
    $region45: #{simple_model2_forward_seq.1} parent=1 // pred_fallthru
      _
    // Predicated region
    $region46: #{simple_model2_forward_seq.1} parent=1 // pred_check
      _
    $region47: #{simple_model2_forward_seq.1} parent=1 // pred_check_branch
      %1134 = sbr.rel (0) target = $region49
    $region48: #{simple_model2_forward_seq.1} parent=1 // pred_region
      _
    $region49: #{simple_model2_forward_seq.1} parent=1 // pred_fallthru
      _
    %1135 = vsyncpa [#allocation3], 1
    %1136 = vsyncpa [#allocation4], 1
    %1137 = vsyncpa [#allocation5], 1

</llo_original>
